<compile_context>
chip_gen: v6e
topology: v6e:2x2x1
jax: 0.10.0
libtpu: 0.0.40
codegen_flags: <defaults>
</compile_context>

<pallas_src>
import functools

import jax
import jax.numpy as jnp
from jax.experimental import pallas as pl
from jax.experimental.pallas import tpu as pltpu


def _gap1d_kernel(x_ref, o_ref, acc_ref, *, inv_l, seq_len, tile_l, mask_tail):
    """Grid = (batch blocks, L blocks). x_ref: (TB, TL, C); o_ref/acc_ref: (TB, C)."""
    l_idx = pl.program_id(1)

    @pl.when(l_idx == 0)
    def _init():
        acc_ref[...] = jnp.zeros_like(acc_ref)

    x = x_ref[...].astype(jnp.float32)                      # (TB, TL, C)
    if mask_tail:
        # Last L tile may run past the true sequence length; zero the overhang.
        row = jax.lax.broadcasted_iota(jnp.int32, x.shape, 1) + l_idx * tile_l
        x = jnp.where(row < seq_len, x, 0.0)

    # Sublane-axis reduction; partial sums accumulate in f32 scratch.
    acc_ref[...] += jnp.sum(x, axis=1)

    @pl.when(l_idx == pl.num_programs(1) - 1)
    def _finalize():
        o_ref[...] = (acc_ref[...] * inv_l).astype(o_ref.dtype)


def global_avg_pool1d(x, *, target_tile_bytes=4 << 20):
    """Mean over dim=1 of a (B, L, C) array -> (B, C). Matches torch.mean(x, dim=1)."""
    B, L, C = x.shape
    itemsize = jnp.dtype(x.dtype).itemsize

    # Batch tile: 8 rows for dense (8, 128)-tile output stores; full B if B < 8.
    tb = min(B, 8)

    # L tile: multiple of 8 sublanes, sized so TB*TL*C*itemsize ~= target_tile_bytes.
    if L < 8:
        tl = L
    else:
        tl = target_tile_bytes // max(1, tb * C * itemsize)
        tl = max(8, (tl // 8) * 8)
        tl = min(tl, (L // 8) * 8)

    grid = (pl.cdiv(B, tb), pl.cdiv(L, tl))

    kernel = functools.partial(
        _gap1d_kernel,
        inv_l=1.0 / L,          # true L -> unbiased mean even with a masked tail
        seq_len=L,
        tile_l=tl,
        mask_tail=(L % tl != 0),
    )

    return pl.pallas_call(
        kernel,
        out_shape=jax.ShapeDtypeStruct((B, C), x.dtype),
        grid_spec=pltpu.PrefetchScalarGridSpec(
            num_scalar_prefetch=0,
            grid=grid,
            in_specs=[pl.BlockSpec((tb, tl, C), lambda b, l: (b, l, 0))],
            out_specs=pl.BlockSpec((tb, C), lambda b, l: (b, 0)),
            scratch_shapes=[pltpu.VMEM((tb, C), jnp.float32)],
        ),
        compiler_params=pltpu.CompilerParams(
            dimension_semantics=("parallel", "arbitrary"),
        ),
    )(x)


if __name__ == "__main__":
    key = jax.random.PRNGKey(0)

    # Main small test (clean shapes, lane-dense C).
    B, L, C = 2, 16, 128
    x = jax.random.normal(key, (B, L, C), dtype=jnp.float32)
    out = jax.block_until_ready(global_avg_pool1d(x))
    ref = jnp.mean(x, axis=1)
    assert out.shape == (B, C)
    assert jnp.allclose(out, ref, atol=1e-5, rtol=1e-5), "f32 mismatch"

    # Ragged L (exercises the masked tail) and small batch / non-128 C.
    x2 = jax.random.normal(jax.random.fold_in(key, 1), (3, 20, 96), dtype=jnp.float32)
    out2 = jax.block_until_ready(global_avg_pool1d(x2))
    ref2 = jnp.mean(x2, axis=1)
    assert jnp.allclose(out2, ref2, atol=1e-5, rtol=1e-5), "ragged-L mismatch"

    # bf16 input streamed at native width, accumulated in f32.
    x3 = jax.random.normal(jax.random.fold_in(key, 2), (8, 64, 128), dtype=jnp.bfloat16)
    out3 = jax.block_until_ready(global_avg_pool1d(x3))
    ref3 = jnp.mean(x3.astype(jnp.float32), axis=1).astype(jnp.bfloat16)
    assert jnp.allclose(out3.astype(jnp.float32), ref3.astype(jnp.float32),
                        atol=2e-2, rtol=2e-2), "bf16 mismatch"

    print("KERNEL_OK")
</pallas_src>

<mosaic_0001>
module attributes {stable_mosaic.version = 11 : i64} {
  func.func @_gap1d_kernel(%arg0: i32, %arg1: i32, %arg2: memref<2x16x128xf32, #tpu.memory_space<vmem>>, %arg3: memref<2x128xf32, #tpu.memory_space<vmem>>, %arg4: memref<2x128xf32, #tpu.memory_space<vmem>>) attributes {dimension_semantics = [#tpu.dimension_semantics<parallel>, #tpu.dimension_semantics<arbitrary>], iteration_bounds = array<i64: 1, 1>, scalar_prefetch = 0 : i64, scratch_operands = 1 : i64, tpu.core_type = #tpu.core_type<tc>, window_params = [{transform_indices = @transform_0, window_bounds = array<i64: 2, 16, 128>}, {transform_indices = @transform_1, window_bounds = array<i64: 2, 128>}]} {
    %c0_i32 = arith.constant 0 : i32
    %0 = arith.cmpi eq, %arg1, %c0_i32 : i32
    %1 = arith.extui %0 : i1 to i32
    %c0_i32_0 = arith.constant 0 : i32
    %2 = arith.cmpi ne, %1, %c0_i32_0 : i32
    scf.if %2 {
      %cst_9 = arith.constant 0.000000e+00 : f32
      %11 = vector.broadcast %cst_9 : f32 to vector<2x128xf32>
      %c0_10 = arith.constant 0 : index
      %c0_11 = arith.constant 0 : index
      %12 = vector.load %arg4[%c0_10, %c0_11] : memref<2x128xf32, #tpu.memory_space<vmem>>, vector<2x128xf32>
      tpu.vector_store %arg4[%c0_10, %c0_11], %11 {strides = array<i32>} : memref<2x128xf32, #tpu.memory_space<vmem>>, vector<2x128xf32>,
    } else {
    }
    %c0 = arith.constant 0 : index
    %c0_1 = arith.constant 0 : index
    %c0_2 = arith.constant 0 : index
    %3 = vector.load %arg2[%c0, %c0_1, %c0_2] : memref<2x16x128xf32, #tpu.memory_space<vmem>>, vector<2x16x128xf32>
    %c0_3 = arith.constant 0 : index
    %c0_4 = arith.constant 0 : index
    %4 = vector.load %arg4[%c0_3, %c0_4] : memref<2x128xf32, #tpu.memory_space<vmem>>, vector<2x128xf32>
    %cst = arith.constant dense<0.000000e+00> : vector<2x128xf32>
    %5 = vector.multi_reduction <add>, %3, %cst [1] : vector<2x16x128xf32> to vector<2x128xf32>
    %6 = arith.addf %4, %5 : vector<2x128xf32>
    %c0_5 = arith.constant 0 : index
    %c0_6 = arith.constant 0 : index
    %7 = vector.load %arg4[%c0_5, %c0_6] : memref<2x128xf32, #tpu.memory_space<vmem>>, vector<2x128xf32>
    tpu.vector_store %arg4[%c0_5, %c0_6], %6 {strides = array<i32>} : memref<2x128xf32, #tpu.memory_space<vmem>>, vector<2x128xf32>,
    %c0_i32_7 = arith.constant 0 : i32
    %8 = arith.cmpi eq, %arg1, %c0_i32_7 : i32
    %9 = arith.extui %8 : i1 to i32
    %c0_i32_8 = arith.constant 0 : i32
    %10 = arith.cmpi ne, %9, %c0_i32_8 : i32
    scf.if %10 {
      %c0_9 = arith.constant 0 : index
      %c0_10 = arith.constant 0 : index
      %11 = vector.load %arg4[%c0_9, %c0_10] : memref<2x128xf32, #tpu.memory_space<vmem>>, vector<2x128xf32>
      %cst_11 = arith.constant 6.250000e-02 : f32
      %12 = vector.broadcast %cst_11 : f32 to vector<2x128xf32>
      %13 = arith.mulf %11, %12 : vector<2x128xf32>
      %c0_12 = arith.constant 0 : index
      %c0_13 = arith.constant 0 : index
      %14 = vector.load %arg3[%c0_12, %c0_13] : memref<2x128xf32, #tpu.memory_space<vmem>>, vector<2x128xf32>
      tpu.vector_store %arg3[%c0_12, %c0_13], %13 {strides = array<i32>} : memref<2x128xf32, #tpu.memory_space<vmem>>, vector<2x128xf32>,
    } else {
    }
    return
  }
  func.func @transform_0(%arg0: i32, %arg1: i32) -> (i32, i32, i32) {
    %c0_i32 = arith.constant 0 : i32
    %c0_i32_0 = arith.constant 0 : i32
    return %arg0, %arg1, %c0_i32 : i32, i32, i32
  }
  func.func @transform_1(%arg0: i32, %arg1: i32) -> (i32, i32) {
    %c0_i32 = arith.constant 0 : i32
    %c0_i32_0 = arith.constant 0 : i32
    return %arg0, %c0_i32 : i32, i32
  }
}

</mosaic_0001>

<llo_original>
// kernel: tpu_custom_call.1
$region0: #{tpu_custom_call.1}
  #allocation0 [shape = 'u32[]', space=smem, size = 0x4, offset = 0x4, fixed_abs, tag = 'smem constant byte address 0x4 - core index']
  #allocation1 [shape = 'u32[144,128]{1,0:T(1,128)}', space=vmem, size = 0x12000, scoped, tag = 'internal scratch']
  #allocation2 [shape = 'f32[2,128]{1,0:T(2,128)}', space=vmem, size = 0x400, scoped, tag = 'scratch operand']
  %s0 = inlined_call_operand.hbm [shape: f32[2,16,128], index: 0, kind: input, shape index: {}]
  %s1 = inlined_call_operand.hbm [shape: f32[2,128], index: 1, kind: output, shape index: {}]
  %s2 = sld [smem:[#allocation0]]
  $region26: #{tpu_custom_call.1} parent=0
    _
  %s4 = ssub.s32 1, %s2
  %s5 = scalar_select 0, %s4, %s2
  $region1: #{tpu_custom_call.1} parent=0
    #allocation3 [shape = 'u8[16384]{0}', space=vmem, size = 0x4000, scoped, tag = 'input window, operand 0, single buffered']
    #allocation4 [shape = 's32[1]{0}', space=sflag, size = 0x4, scoped, tag = 'scoped memory for tpu_custom_call.1']
    #allocation5 [shape = 's32[1]{0}', space=sflag, size = 0x4, scoped, tag = 'scoped memory for tpu_custom_call.1']
    #allocation6 [shape = 'u8[1024]{0}', space=vmem, size = 0x400, scoped, tag = 'output window, operand 0, single buffered']
    %6 = vsyncpa [#allocation4], 0
    %7 = vsyncpa [#allocation5], 0
    // Predicated region
    $region2: #{tpu_custom_call.1} parent=1 // pred_check
      _
    $region3: #{tpu_custom_call.1} parent=1 // pred_check_branch
      %9 = sbr.rel (0) target = $region5
    $region4: #{tpu_custom_call.1} parent=1 // pred_region
      %s11 = ssub.s32 512, 512
      %12 = vsyncadd [#allocation4], %s11
      %s13 = sshll.u32 [#allocation3], 4
      %s14 = int_to_ptr.vmem [resolvable:$true] %s13
      %19 = dma.hbm_to_vmem [thread:$0]  %s0, 512, %s14, [#allocation4], 128, 128, 8
    $region5: #{tpu_custom_call.1} parent=1 // pred_fallthru
      _
    // Predicated region
    $region6: #{tpu_custom_call.1} parent=1 // pred_check
      _
    $region7: #{tpu_custom_call.1} parent=1 // pred_check_branch
      %21 = sbr.rel (0) target = $region9
    $region8: #{tpu_custom_call.1} parent=1 // pred_region
      %22 = dma.done [#allocation4], 512
    $region9: #{tpu_custom_call.1} parent=1 // pred_fallthru
      _
    %p23 = scmp.eq.s32.totalorder 0, 0
    // Predicated region
    $region10: #{tpu_custom_call.1} parent=1 // pred_check
      %p24 = pneg %p23
    $region11: #{tpu_custom_call.1} parent=1 // pred_check_branch
      %26 = sbr.rel (%p24) target = $region13
    $region12: #{tpu_custom_call.1} parent=1 // pred_region
      %27 = vst [vmem:[#allocation2] sm:$0x3] 0.0
    $region13: #{tpu_custom_call.1} parent=1 // pred_fallthru
      _
    %v28 = vld [vmem:[#allocation3] sm:$0xff]
    %v29 = vld [vmem:[#allocation3 + $0x8] sm:$0xff]
    %v30 = vld [vmem:[#allocation3 + $0x10] sm:$0xff]
    %v31 = vld [vmem:[#allocation3 + $0x18] sm:$0xff]
    %v32 = vld [vmem:[#allocation2] sm:$0x3]
    %v33 = vadd.f32 %v28, %v29
    %v34 = vrot.slane %v33, 4
    %v35 = vadd.f32 %v33, %v34
    %v36 = vrot.slane %v35, 2
    %v37 = vadd.f32 %v35, %v36
    %v38 = vrot.slane %v37, 1
    %v39 = vadd.f32 %v37, %v38
    %v40 = vadd.f32 %v30, %v31
    %v41 = vrot.slane %v40, 4
    %v42 = vadd.f32 %v40, %v41
    %v43 = vrot.slane %v42, 2
    %v44 = vadd.f32 %v42, %v43
    %v45 = vrot.slane %v44, 1
    %v46 = vadd.f32 %v44, %v45
    %vm49 = vcmask 1041409
    %v50 = vsel %vm49, %v46, %v39
    %v52 = vadd.f32 %v32, %v50
    %53 = vst [vmem:[#allocation2] sm:$0x3] %v52
    // Predicated region
    $region14: #{tpu_custom_call.1} parent=1 // pred_check
      %p54 = pneg %p23
    $region15: #{tpu_custom_call.1} parent=1 // pred_check_branch
      %56 = sbr.rel (%p54) target = $region17
    $region16: #{tpu_custom_call.1} parent=1 // pred_region
      %v57 = vld [vmem:[#allocation2] sm:$0x3]
      %v58 = vmul.f32 %v57, 0.0625
      %59 = vst [vmem:[#allocation6] sm:$0x3] %v58
    $region17: #{tpu_custom_call.1} parent=1 // pred_fallthru
      _
    // Predicated region
    $region18: #{tpu_custom_call.1} parent=1 // pred_check
      _
    $region19: #{tpu_custom_call.1} parent=1 // pred_check_branch
      %61 = sbr.rel (0) target = $region21
    $region20: #{tpu_custom_call.1} parent=1 // pred_region
      %s63 = ssub.s32 32, 32
      %64 = vsyncadd [#allocation5], %s63
      %s66 = sshll.u32 [#allocation6], 4
      %s67 = int_to_ptr.vmem [resolvable:$true] %s66
      %69 = dma.vmem_to_hbm [thread:$0]  %s67, 32, %s1, [#allocation5]
    $region21: #{tpu_custom_call.1} parent=1 // pred_fallthru
      _
    // Predicated region
    $region22: #{tpu_custom_call.1} parent=1 // pred_check
      _
    $region23: #{tpu_custom_call.1} parent=1 // pred_check_branch
      %71 = sbr.rel (0) target = $region25
    $region24: #{tpu_custom_call.1} parent=1 // pred_region
      %72 = dma.done [#allocation5], 32
    $region25: #{tpu_custom_call.1} parent=1 // pred_fallthru
      _
    %73 = vsyncpa [#allocation4], 1
    %74 = vsyncpa [#allocation5], 1

</llo_original>
